<compile_context>
chip_gen: v5e
topology: v5e:2x2
jax: 0.10.0
libtpu: 0.0.40
codegen_flags: <defaults>
</compile_context>

<pallas_src>
import jax
import jax.numpy as jnp
from jax import lax
from jax.experimental import pallas as pl
from jax.experimental.pallas import tpu as pltpu


def _round_up(x, m):
    return ((x + m - 1) // m) * m


# Contract the last dim of both operands (A @ B^T) -- NT matmul on the MXU.
_NT_DIMS = (((1,), (1,)), ((), ()))


def _make_vnet_kernel(num_hidden):
    """Build a fused MLP-critic kernel with `num_hidden` tanh hidden layers."""

    def kernel(*refs):
        x_ref, *wb_refs, o_ref = refs
        h = x_ref[...]
        for layer in range(num_hidden):
            w = wb_refs[2 * layer][...]          # (in, out) -- MXU matmul
            b = wb_refs[2 * layer + 1][...]      # (1, out)  -- VPU broadcast add
            h = jnp.tanh(jnp.dot(h, w, preferred_element_type=jnp.float32) + b)
        # Final layer (out_features == 1): produce a lane-dense (1, TB) row
        # instead of a (TB, 1) column.  w_rows is the output weight padded to
        # 8 sublanes (row 0 is real, rows 1..7 are zero) so the NT matmul is
        # tile-aligned; the (8, TB) result costs no extra vregs vs (1, TB).
        w_rows = wb_refs[-2][...]                # (8, H_last)
        b_out = wb_refs[-1][...]                 # (1, 1)
        rows = lax.dot_general(w_rows, h, _NT_DIMS,
                               preferred_element_type=jnp.float32)   # (8, TB)
        o_ref[0] = (rows[0:1, :] + b_out).astype(o_ref.dtype)        # (1, TB)

    return kernel


def vnetwork_forward(obs, params, *, block_b=8192):
    """Fused VNetwork forward.

    obs:    (B, input_dim) array (f32; bf16 also accepted).
    params: list of (W, b) pairs, W of shape (in, out), b of shape (1, out);
            the last layer must have out == 1.
    Returns (B,) float32 -- equivalent to torch.squeeze(v_net(obs), -1).
    """
    hidden = params[:-1]
    w_last, b_last = params[-1]
    B, D = obs.shape
    assert w_last.shape[-1] == 1, "final layer must have a single output unit"

    # Batch tile: multiple of 8 (sublane quantum), capped at block_b.
    tb = min(_round_up(max(B, 1), 8), _round_up(block_b, 8))
    Bp = _round_up(B, tb)
    if Bp != B:
        obs = jnp.pad(obs, ((0, Bp - B), (0, 0)))
    num_tiles = Bp // tb

    const_map = lambda i: (0, 0)                           # weights: VMEM-resident
    in_specs = [pl.BlockSpec((tb, D), lambda i: (i, 0))]   # obs: streamed
    flat_args = [obs]
    for (w, b) in hidden:
        b2 = b.reshape(1, -1)
        in_specs.append(pl.BlockSpec(w.shape, const_map))
        in_specs.append(pl.BlockSpec(b2.shape, const_map))
        flat_args.extend([w, b2])

    # Output-layer weight as an (8, H_last) row block: row 0 holds the real
    # weights, rows 1..7 are zero.  Keeps the in-kernel NT matmul sublane-
    # aligned at zero extra cost.
    h_last = w_last.shape[0]
    w_rows = jnp.zeros((8, h_last), w_last.dtype).at[0, :].set(w_last[:, 0])
    b_out = b_last.reshape(1, 1)
    in_specs.append(pl.BlockSpec((8, h_last), const_map))
    in_specs.append(pl.BlockSpec((1, 1), const_map))
    flat_args.extend([w_rows, b_out])

    out = pl.pallas_call(
        _make_vnet_kernel(len(hidden)),
        out_shape=jax.ShapeDtypeStruct((num_tiles, 1, tb), jnp.float32),
        grid=(num_tiles,),
        in_specs=in_specs,
        # Lane-dense output: one (1, TB) row per batch tile.
        out_specs=pl.BlockSpec((1, 1, tb), lambda i: (i, 0, 0)),
        compiler_params=pltpu.CompilerParams(
            dimension_semantics=("parallel",),
        ),
    )(*flat_args)

    # glue: torch.squeeze(v_value, -1) + drop batch padding.
    return out.reshape(-1)[:B]


def init_params(key, sizes):
    """Deterministic init mimicking torch.nn.Linear default (U[-1/sqrt(fan_in), +])."""
    params = []
    for i in range(len(sizes) - 1):
        fan_in, fan_out = sizes[i], sizes[i + 1]
        key, kw, kb = jax.random.split(key, 3)
        bound = 1.0 / jnp.sqrt(jnp.float32(fan_in))
        w = jax.random.uniform(kw, (fan_in, fan_out), jnp.float32, -bound, bound)
        b = jax.random.uniform(kb, (1, fan_out), jnp.float32, -bound, bound)
        params.append((w, b))
    return params


if __name__ == "__main__":
    # Small shapes consistent with the module: obs dim 16, hidden [32, 32], batch 8.
    B, INPUT_DIM = 8, 16
    HIDDEN_SIZES = [32, 32]
    sizes = [INPUT_DIM] + HIDDEN_SIZES + [1]

    key = jax.random.PRNGKey(0)
    key, k_obs = jax.random.split(key)
    obs = jax.random.normal(k_obs, (B, INPUT_DIM), dtype=jnp.float32)
    params = init_params(key, sizes)

    def ref_fwd(o):
        h = o
        for (w, b) in params[:-1]:
            h = jnp.tanh(h @ w + b)
        w_l, b_l = params[-1]
        return jnp.squeeze(h @ w_l + b_l, -1)

    v = vnetwork_forward(obs, params)
    jax.block_until_ready(v)
    assert v.shape == (B,), f"expected shape {(B,)}, got {v.shape}"
    assert jnp.allclose(v, ref_fwd(obs), atol=1e-5, rtol=1e-5), "kernel mismatch vs reference"

    # Exercise the batch grid + padding path (B not a multiple of the tile).
    B2 = 200
    key, k_obs2 = jax.random.split(key)
    obs2 = jax.random.normal(k_obs2, (B2, INPUT_DIM), dtype=jnp.float32)
    v2 = vnetwork_forward(obs2, params, block_b=64)   # tb=64, grid=4, 56 padded rows
    jax.block_until_ready(v2)
    assert v2.shape == (B2,), f"expected shape {(B2,)}, got {v2.shape}"
    assert jnp.allclose(v2, ref_fwd(obs2), atol=1e-5, rtol=1e-5), "tiled kernel mismatch"

    print("KERNEL_OK")
</pallas_src>

<mosaic_0001>
module attributes {stable_mosaic.version = 11 : i64} {
  func.func @kernel(%arg0: i32, %arg1: memref<8x16xf32, #tpu.memory_space<vmem>>, %arg2: memref<16x32xf32, #tpu.memory_space<vmem>>, %arg3: memref<1x32xf32, #tpu.memory_space<vmem>>, %arg4: memref<32x32xf32, #tpu.memory_space<vmem>>, %arg5: memref<1x32xf32, #tpu.memory_space<vmem>>, %arg6: memref<8x32xf32, #tpu.memory_space<vmem>>, %arg7: memref<1x1xf32, #tpu.memory_space<vmem>>, %arg8: memref<1x1x8xf32, #tpu.memory_space<vmem>>) attributes {dimension_semantics = [#tpu.dimension_semantics<parallel>], iteration_bounds = array<i64: 1>, scalar_prefetch = 0 : i64, scratch_operands = 0 : i64, tpu.core_type = #tpu.core_type<tc>, window_params = [{transform_indices = @transform_0, window_bounds = array<i64: 8, 16>}, {pipeline_mode = #tpu.pipeline_mode<synchronous>, transform_indices = @transform_1, window_bounds = array<i64: 16, 32>}, {pipeline_mode = #tpu.pipeline_mode<synchronous>, transform_indices = @transform_2, window_bounds = array<i64: 1, 32>}, {pipeline_mode = #tpu.pipeline_mode<synchronous>, transform_indices = @transform_3, window_bounds = array<i64: 32, 32>}, {pipeline_mode = #tpu.pipeline_mode<synchronous>, transform_indices = @transform_4, window_bounds = array<i64: 1, 32>}, {pipeline_mode = #tpu.pipeline_mode<synchronous>, transform_indices = @transform_5, window_bounds = array<i64: 8, 32>}, {pipeline_mode = #tpu.pipeline_mode<synchronous>, transform_indices = @transform_6, window_bounds = array<i64: 1, 1>}, {transform_indices = @transform_7, window_bounds = array<i64: 1, 1, 8>}]} {
    %c0 = arith.constant 0 : index
    %c0_0 = arith.constant 0 : index
    %0 = vector.load %arg1[%c0, %c0_0] : memref<8x16xf32, #tpu.memory_space<vmem>>, vector<8x16xf32>
    %c0_1 = arith.constant 0 : index
    %c0_2 = arith.constant 0 : index
    %1 = vector.load %arg2[%c0_1, %c0_2] : memref<16x32xf32, #tpu.memory_space<vmem>>, vector<16x32xf32>
    %c0_3 = arith.constant 0 : index
    %c0_4 = arith.constant 0 : index
    %2 = vector.load %arg3[%c0_3, %c0_4] : memref<1x32xf32, #tpu.memory_space<vmem>>, vector<1x32xf32>
    %cst = arith.constant dense<0.000000e+00> : vector<8x32xf32>
    %3 = tpu.matmul %0, %1, %cst {dimension_numbers = #tpu.dot_dimension_numbers<[1], [0], [0], [1], [0, 0, 1, 1], [], []>} : vector<8x16xf32>, vector<16x32xf32>, vector<8x32xf32> -> vector<8x32xf32>
    %4 = vector.broadcast %2 : vector<1x32xf32> to vector<8x32xf32>
    %5 = arith.addf %3, %4 : vector<8x32xf32>
    %6 = math.tanh %5 : vector<8x32xf32>
    %c0_5 = arith.constant 0 : index
    %c0_6 = arith.constant 0 : index
    %7 = vector.load %arg4[%c0_5, %c0_6] : memref<32x32xf32, #tpu.memory_space<vmem>>, vector<32x32xf32>
    %c0_7 = arith.constant 0 : index
    %c0_8 = arith.constant 0 : index
    %8 = vector.load %arg5[%c0_7, %c0_8] : memref<1x32xf32, #tpu.memory_space<vmem>>, vector<1x32xf32>
    %cst_9 = arith.constant dense<0.000000e+00> : vector<8x32xf32>
    %9 = tpu.matmul %6, %7, %cst_9 {dimension_numbers = #tpu.dot_dimension_numbers<[1], [0], [0], [1], [0, 0, 1, 1], [], []>} : vector<8x32xf32>, vector<32x32xf32>, vector<8x32xf32> -> vector<8x32xf32>
    %10 = vector.broadcast %8 : vector<1x32xf32> to vector<8x32xf32>
    %11 = arith.addf %9, %10 : vector<8x32xf32>
    %12 = math.tanh %11 : vector<8x32xf32>
    %c0_10 = arith.constant 0 : index
    %c0_11 = arith.constant 0 : index
    %13 = vector.load %arg6[%c0_10, %c0_11] : memref<8x32xf32, #tpu.memory_space<vmem>>, vector<8x32xf32>
    %c0_12 = arith.constant 0 : index
    %c0_13 = arith.constant 0 : index
    %14 = vector.load %arg7[%c0_12, %c0_13] : memref<1x1xf32, #tpu.memory_space<vmem>>, vector<1x1xf32>
    %cst_14 = arith.constant dense<0.000000e+00> : vector<8x8xf32>
    %15 = tpu.matmul %13, %12, %cst_14 {dimension_numbers = #tpu.dot_dimension_numbers<[1], [1], [0], [0], [0, 0, 1, 0], [], []>} : vector<8x32xf32>, vector<8x32xf32>, vector<8x8xf32> -> vector<8x8xf32>
    %16 = vector.extract_strided_slice %15 {offsets = [0, 0], sizes = [1, 8], strides = [1, 1]} : vector<8x8xf32> to vector<1x8xf32>
    %17 = vector.broadcast %14 : vector<1x1xf32> to vector<1x8xf32>
    %18 = arith.addf %16, %17 : vector<1x8xf32>
    %c0_15 = arith.constant 0 : index
    %c0_16 = arith.constant 0 : index
    %c0_17 = arith.constant 0 : index
    %19 = vector.load %arg8[%c0_15, %c0_16, %c0_17] : memref<1x1x8xf32, #tpu.memory_space<vmem>>, vector<1x1x8xf32>
    %20 = vector.shape_cast %19 : vector<1x1x8xf32> to vector<1x8xf32>
    %21 = vector.shape_cast %18 : vector<1x8xf32> to vector<1x1x8xf32>
    tpu.vector_store %arg8[%c0_15, %c0_16, %c0_17], %21 {strides = array<i32>} : memref<1x1x8xf32, #tpu.memory_space<vmem>>, vector<1x1x8xf32>,
    return
  }
  func.func @transform_0(%arg0: i32) -> (i32, i32) {
    %c0_i32 = arith.constant 0 : i32
    %c0_i32_0 = arith.constant 0 : i32
    return %arg0, %c0_i32 : i32, i32
  }
  func.func @transform_1(%arg0: i32) -> (i32, i32) {
    %c0_i32 = arith.constant 0 : i32
    %c0_i32_0 = arith.constant 0 : i32
    %c0_i32_1 = arith.constant 0 : i32
    return %c0_i32, %c0_i32_0 : i32, i32
  }
  func.func @transform_2(%arg0: i32) -> (i32, i32) {
    %c0_i32 = arith.constant 0 : i32
    %c0_i32_0 = arith.constant 0 : i32
    %c0_i32_1 = arith.constant 0 : i32
    return %c0_i32, %c0_i32_0 : i32, i32
  }
  func.func @transform_3(%arg0: i32) -> (i32, i32) {
    %c0_i32 = arith.constant 0 : i32
    %c0_i32_0 = arith.constant 0 : i32
    %c0_i32_1 = arith.constant 0 : i32
    return %c0_i32, %c0_i32_0 : i32, i32
  }
  func.func @transform_4(%arg0: i32) -> (i32, i32) {
    %c0_i32 = arith.constant 0 : i32
    %c0_i32_0 = arith.constant 0 : i32
    %c0_i32_1 = arith.constant 0 : i32
    return %c0_i32, %c0_i32_0 : i32, i32
  }
  func.func @transform_5(%arg0: i32) -> (i32, i32) {
    %c0_i32 = arith.constant 0 : i32
    %c0_i32_0 = arith.constant 0 : i32
    %c0_i32_1 = arith.constant 0 : i32
    return %c0_i32, %c0_i32_0 : i32, i32
  }
  func.func @transform_6(%arg0: i32) -> (i32, i32) {
    %c0_i32 = arith.constant 0 : i32
    %c0_i32_0 = arith.constant 0 : i32
    %c0_i32_1 = arith.constant 0 : i32
    return %c0_i32, %c0_i32_0 : i32, i32
  }
  func.func @transform_7(%arg0: i32) -> (i32, i32, i32) {
    %c0_i32 = arith.constant 0 : i32
    %c0_i32_0 = arith.constant 0 : i32
    %c0_i32_1 = arith.constant 0 : i32
    return %arg0, %c0_i32, %c0_i32_0 : i32, i32, i32
  }
}

</mosaic_0001>

<llo_original>
// kernel: tpu_custom_call.1
$region0: #{tpu_custom_call.1}
  #allocation0 [shape = 'u32[]', space=smem, size = 0x4, offset = 0x4, fixed_abs, tag = 'smem constant byte address 0x4 - core index']
  #allocation1 [shape = 'u32[72,128]{1,0:T(1,128)}', space=vmem, size = 0x9000, scoped, tag = 'internal scratch']
  #allocation2 [shape = 'f32[1,1]{1,0:T(1,128)S(1)}', space=vmem, size = 0x200, scoped, tag = 'scoped memory for tpu_custom_call.1']
  %s0 = inlined_call_operand.hbm [shape: f32[8,16], index: 0, kind: input, shape index: {}]
  %s1 = inlined_call_operand.hbm [shape: f32[16,32], index: 1, kind: input, shape index: {}]
  %s2 = inlined_call_operand.vmem [shape: f32[1,32], index: 2, kind: input, shape index: {}]
  %s3 = inlined_call_operand.hbm [shape: f32[32,32], index: 3, kind: input, shape index: {}]
  %s4 = inlined_call_operand.vmem [shape: f32[1,32], index: 4, kind: input, shape index: {}]
  %s5 = inlined_call_operand.hbm [shape: f32[8,32], index: 5, kind: input, shape index: {}]
  %s6 = inlined_call_operand.<no memory space> [shape: f32[1,1], index: 6, kind: input, shape index: {}]
  %s7 = inlined_call_operand.hbm [shape: f32[1,1,8], index: 7, kind: output, shape index: {}]
  %s8 = sld [smem:[#allocation0]]
  $region54: #{tpu_custom_call.1} parent=0
    _
  %s10 = ssub.s32 1, %s8
  %s11 = scalar_select 0, %s10, %s8
  %v12 = vstv %s6
  %13 = vst [vmem:[#allocation2] sm:$0x1] %v12
  $region1: #{tpu_custom_call.1} parent=0
    #allocation3 [shape = 'u8[4096]{0}', space=vmem, size = 0x1000, scoped, tag = 'input window, operand 0, single buffered']
    #allocation4 [shape = 's32[1]{0}', space=sflag, size = 0x4, scoped, tag = 'scoped memory for tpu_custom_call.1']
    #allocation5 [shape = 's32[1]{0}', space=sflag, size = 0x4, scoped, tag = 'scoped memory for tpu_custom_call.1']
    #allocation6 [shape = 'u8[8192]{0}', space=vmem, size = 0x2000, scoped, tag = 'input window, operand 1, single buffered']
    #allocation7 [shape = 's32[1]{0}', space=sflag, size = 0x4, scoped, tag = 'scoped memory for tpu_custom_call.1']
    #allocation8 [shape = 'u8[16384]{0}', space=vmem, size = 0x4000, scoped, tag = 'input window, operand 3, single buffered']
    #allocation9 [shape = 'u8[4096]{0}', space=vmem, size = 0x1000, scoped, tag = 'input window, operand 5, single buffered']
    #allocation10 [shape = 's32[1]{0}', space=sflag, size = 0x4, scoped, tag = 'scoped memory for tpu_custom_call.1']
    #allocation11 [shape = 'u8[512]{0}', space=vmem, size = 0x400, scoped, tag = 'output window, operand 0, single buffered']
    %14 = vsyncpa [#allocation4], 0
    %15 = vsyncpa [#allocation7], 0
    %16 = vsyncpa [#allocation10], 0
    %17 = vsyncpa [#allocation5], 0
    // Predicated region
    $region2: #{tpu_custom_call.1} parent=1 // pred_check
      _
    $region3: #{tpu_custom_call.1} parent=1 // pred_check_branch
      %19 = sbr.rel (0) target = $region5
    $region4: #{tpu_custom_call.1} parent=1 // pred_region
      %21 = vsyncadd [#allocation4], 0
      %s23 = sshll.u32 %s0, 4
      %s24 = int_to_ptr.hbm [resolvable:$true] %s23
      %s25 = sshll.u32 [#allocation3], 4
      %s26 = int_to_ptr.vmem [resolvable:$true] %s25
      %28 = dma.hbm_to_vmem [thread:$0]  %s24, 128, %s26, [#allocation4]
    $region5: #{tpu_custom_call.1} parent=1 // pred_fallthru
      _
    // Predicated region
    $region6: #{tpu_custom_call.1} parent=1 // pred_check
      _
    $region7: #{tpu_custom_call.1} parent=1 // pred_check_branch
      %30 = sbr.rel (0) target = $region9
    $region8: #{tpu_custom_call.1} parent=1 // pred_region
      %32 = vsyncadd [#allocation7], 0
      %s33 = sshll.u32 %s1, 4
      %s34 = int_to_ptr.hbm [resolvable:$true] %s33
      %s35 = sshll.u32 [#allocation6], 4
      %s36 = int_to_ptr.vmem [resolvable:$true] %s35
      %41 = dma.hbm_to_vmem [thread:$0]  %s34, 256, %s36, [#allocation7], 128, 128, 8
    $region9: #{tpu_custom_call.1} parent=1 // pred_fallthru
      _
    // Predicated region
    $region10: #{tpu_custom_call.1} parent=1 // pred_check
      _
    $region11: #{tpu_custom_call.1} parent=1 // pred_check_branch
      %43 = sbr.rel (0) target = $region13
    $region12: #{tpu_custom_call.1} parent=1 // pred_region
      _
    $region13: #{tpu_custom_call.1} parent=1 // pred_fallthru
      _
    // Predicated region
    $region14: #{tpu_custom_call.1} parent=1 // pred_check
      _
    $region15: #{tpu_custom_call.1} parent=1 // pred_check_branch
      %45 = sbr.rel (0) target = $region17
    $region16: #{tpu_custom_call.1} parent=1 // pred_region
      %47 = vsyncadd [#allocation7], 0
      %s48 = sshll.u32 %s3, 4
      %s49 = int_to_ptr.hbm [resolvable:$true] %s48
      %s50 = sshll.u32 [#allocation8], 4
      %s51 = int_to_ptr.vmem [resolvable:$true] %s50
      %56 = dma.hbm_to_vmem [thread:$0]  %s49, 512, %s51, [#allocation7], 128, 128, 8
    $region17: #{tpu_custom_call.1} parent=1 // pred_fallthru
      _
    // Predicated region
    $region18: #{tpu_custom_call.1} parent=1 // pred_check
      _
    $region19: #{tpu_custom_call.1} parent=1 // pred_check_branch
      %58 = sbr.rel (0) target = $region21
    $region20: #{tpu_custom_call.1} parent=1 // pred_region
      _
    $region21: #{tpu_custom_call.1} parent=1 // pred_fallthru
      _
    // Predicated region
    $region22: #{tpu_custom_call.1} parent=1 // pred_check
      _
    $region23: #{tpu_custom_call.1} parent=1 // pred_check_branch
      %60 = sbr.rel (0) target = $region25
    $region24: #{tpu_custom_call.1} parent=1 // pred_region
      %62 = vsyncadd [#allocation10], 0
      %s64 = sshll.u32 %s5, 4
      %s65 = int_to_ptr.hbm [resolvable:$true] %s64
      %s66 = sshll.u32 [#allocation9], 4
      %s67 = int_to_ptr.vmem [resolvable:$true] %s66
      %69 = dma.hbm_to_vmem [thread:$0]  %s65, 128, %s67, [#allocation10]
    $region25: #{tpu_custom_call.1} parent=1 // pred_fallthru
      _
    // Predicated region
    $region26: #{tpu_custom_call.1} parent=1 // pred_check
      _
    $region27: #{tpu_custom_call.1} parent=1 // pred_check_branch
      %71 = sbr.rel (0) target = $region29
    $region28: #{tpu_custom_call.1} parent=1 // pred_region
      _
    $region29: #{tpu_custom_call.1} parent=1 // pred_fallthru
      _
    // Predicated region
    $region30: #{tpu_custom_call.1} parent=1 // pred_check
      _
    $region31: #{tpu_custom_call.1} parent=1 // pred_check_branch
      %73 = sbr.rel (0) target = $region33
    $region32: #{tpu_custom_call.1} parent=1 // pred_region
      %75 = dma.done [#allocation4], 128
    $region33: #{tpu_custom_call.1} parent=1 // pred_fallthru
      _
    // Predicated region
    $region34: #{tpu_custom_call.1} parent=1 // pred_check
      _
    $region35: #{tpu_custom_call.1} parent=1 // pred_check_branch
      %77 = sbr.rel (0) target = $region37
    $region36: #{tpu_custom_call.1} parent=1 // pred_region
      %79 = dma.done [#allocation7], 256
    $region37: #{tpu_custom_call.1} parent=1 // pred_fallthru
      _
    // Predicated region
    $region38: #{tpu_custom_call.1} parent=1 // pred_check
      _
    $region39: #{tpu_custom_call.1} parent=1 // pred_check_branch
      %81 = sbr.rel (0) target = $region41
    $region40: #{tpu_custom_call.1} parent=1 // pred_region
      %83 = dma.done [#allocation7], 512
    $region41: #{tpu_custom_call.1} parent=1 // pred_fallthru
      _
    // Predicated region
    $region42: #{tpu_custom_call.1} parent=1 // pred_check
      _
    $region43: #{tpu_custom_call.1} parent=1 // pred_check_branch
      %85 = sbr.rel (0) target = $region45
    $region44: #{tpu_custom_call.1} parent=1 // pred_region
      %87 = dma.done [#allocation10], 128
    $region45: #{tpu_custom_call.1} parent=1 // pred_fallthru
      _
    %v88 = vld [vmem:[#allocation3] sm:$0xff]
    %v89 = vld [vmem:[#allocation6] sm:$0xff]
    %v90 = vld [vmem:[#allocation6 + $0x8] sm:$0xff]
    %v91 = vld [vmem:[%s2] sm:$0x1]
    %v93 = vperm.slane %v91, 0
    %vm95 = vcmask 130048
    %v97 = vsel %vm95, %v88, 0
    %99 = vmatpush.msra.mxu0 0.0
    %100 = vmatpush.msra.mxu0 0.0
    %101 = vmatpush.msra.mxu0 0.0
    %102 = vmatpush.msra.mxu0 0.0
    %103 = vmatpush.msra.mxu0 0.0
    %104 = vmatpush.msra.mxu0 0.0
    %105 = vmatpush.msra.mxu0 0.0
    %106 = vmatpush.msra.mxu0 0.0
    %107 = vmatpush.msra.mxu0 0.0
    %108 = vmatpush.msra.mxu0 0.0
    %109 = vmatpush.msra.mxu0 0.0
    %110 = vmatpush.msra.mxu0 0.0
    %111 = vmatpush.msra.mxu0 0.0
    %112 = vmatpush.msra.mxu0 0.0
    %113 = vmatpush.msra.mxu0 %v90
    %114 = vmatpush.msra.mxu0 %v89
    %115 = vmatmul.f32.gmra.mxu0 %v97
    %v116 = vpop.f32.mrf.mxu0
    %v117 = vadd.f32 %v93, %v116
    %118 = vdwg.mxu0
    %v119 = vtanh.pop %v117
    %v120 = vld [vmem:[#allocation8] sm:$0xff]
    %v121 = vld [vmem:[#allocation8 + $0x8] sm:$0xff]
    %v122 = vld [vmem:[#allocation8 + $0x10] sm:$0xff]
    %v123 = vld [vmem:[#allocation8 + $0x18] sm:$0xff]
    %v124 = vld [vmem:[%s4] sm:$0x1]
    %v126 = vperm.slane %v124, 0
    %vm128 = vcmask 261120
    %v130 = vsel %vm128, %v119, 0
    %132 = vmatpush.msra.mxu0 0.0
    %133 = vmatpush.msra.mxu0 0.0
    %134 = vmatpush.msra.mxu0 0.0
    %135 = vmatpush.msra.mxu0 0.0
    %136 = vmatpush.msra.mxu0 0.0
    %137 = vmatpush.msra.mxu0 0.0
    %138 = vmatpush.msra.mxu0 0.0
    %139 = vmatpush.msra.mxu0 0.0
    %140 = vmatpush.msra.mxu0 0.0
    %141 = vmatpush.msra.mxu0 0.0
    %142 = vmatpush.msra.mxu0 0.0
    %143 = vmatpush.msra.mxu0 0.0
    %144 = vmatpush.msra.mxu0 %v123
    %145 = vmatpush.msra.mxu0 %v122
    %146 = vmatpush.msra.mxu0 %v121
    %147 = vmatpush.msra.mxu0 %v120
    %148 = vmatmul.f32.gmra.mxu0 %v130
    %v149 = vpop.f32.mrf.mxu0
    %v150 = vadd.f32 %v126, %v149
    %151 = vdwg.mxu0
    %v152 = vtanh.pop %v150
    %v153 = vld [vmem:[#allocation9] sm:$0xff]
    %v154 = vld [vmem:[#allocation2] sm:$0x1]
    %v156 = vsel %vm128, %v153, 0
    %v159 = vsel %vm128, %v152, 0
    %161 = vmatpush.xpose.msra.mxu0 0.0
    %162 = vmatpush.xpose.msra.mxu0 0.0
    %163 = vmatpush.xpose.msra.mxu0 0.0
    %164 = vmatpush.xpose.msra.mxu0 0.0
    %165 = vmatpush.xpose.msra.mxu0 0.0
    %166 = vmatpush.xpose.msra.mxu0 0.0
    %167 = vmatpush.xpose.msra.mxu0 0.0
    %168 = vmatpush.xpose.msra.mxu0 0.0
    %169 = vmatpush.xpose.msra.mxu0 0.0
    %170 = vmatpush.xpose.msra.mxu0 0.0
    %171 = vmatpush.xpose.msra.mxu0 0.0
    %172 = vmatpush.xpose.msra.mxu0 0.0
    %173 = vmatpush.xpose.msra.mxu0 0.0
    %174 = vmatpush.xpose.msra.mxu0 0.0
    %175 = vmatpush.xpose.msra.mxu0 0.0
    %176 = vmatpush.xpose.msra.mxu0 %v159
    %177 = vmatmul.f32.gmra.mxu0 %v156
    %v178 = vpop.f32.mrf.mxu0
    %v179 = vadd.f32 0.0, %v178
    %180 = vdwg.mxu0
    %182 = vset.pattern.permute.xlu0 0
    %183 = vperm.xlu0 %182, %v154
    %v184 = vpop.permute.xlu0 %183
    %v186 = vperm.slane %v184, 0
    %v187 = vadd.f32 %v179, %v186
    %vm188 = vcmask 57344
    %189 = vst.msk [vmem:[#allocation11] sm:$0x1] %vm188, %v187
    // Predicated region
    $region46: #{tpu_custom_call.1} parent=1 // pred_check
      _
    $region47: #{tpu_custom_call.1} parent=1 // pred_check_branch
      %191 = sbr.rel (0) target = $region49
    $region48: #{tpu_custom_call.1} parent=1 // pred_region
      %193 = vsyncadd [#allocation5], 0
      %s195 = sshll.u32 [#allocation11], 4
      %s196 = int_to_ptr.vmem [resolvable:$true] %s195
      %s197 = sshll.u32 %s7, 4
      %s198 = int_to_ptr.hbm [resolvable:$true] %s197
      %200 = dma.vmem_to_hbm [thread:$0]  %s196, 16, %s198, [#allocation5]
    $region49: #{tpu_custom_call.1} parent=1 // pred_fallthru
      _
    // Predicated region
    $region50: #{tpu_custom_call.1} parent=1 // pred_check
      _
    $region51: #{tpu_custom_call.1} parent=1 // pred_check_branch
      %202 = sbr.rel (0) target = $region53
    $region52: #{tpu_custom_call.1} parent=1 // pred_region
      %204 = dma.done [#allocation5], 16
    $region53: #{tpu_custom_call.1} parent=1 // pred_fallthru
      _
    %205 = vsyncpa [#allocation4], 1
    %206 = vsyncpa [#allocation7], 1
    %207 = vsyncpa [#allocation10], 1
    %208 = vsyncpa [#allocation5], 1

</llo_original>
